<compile_context>
chip_gen: v5e
topology: v5e:2x2
jax: 0.10.0
libtpu: 0.0.40
codegen_flags: <defaults>
</compile_context>

<pallas_src>
import jax
import jax.numpy as jnp
from jax.experimental import pallas as pl
from jax.experimental.pallas import tpu as pltpu


def _choose_tile_n(n, budget_bytes=8 << 20):
    """Largest n-tile whose (TN, N) softmax slab (~12 B/elem) fits the budget."""
    if n * n * 12 <= budget_bytes:
        return n                      # whole-row slab fits (small images)
    best = None
    for t in range(128, n, 128):      # multiples of 128 that divide N
        if n % t == 0 and t * n * 12 <= budget_bytes:
            best = t
    return best if best is not None else n


def _make_kernel(C, Cq, N, TN):
    Ctot = 2 * Cq + C

    def kernel(gamma_ref, x_ref, w_ref, b_ref, o_ref, q_s, k_s, v_s, acc_s):
        n = pl.program_id(1)
        n_last = pl.num_programs(1) - 1

        # --- once per image: fused q/k/v projection + accumulator init -------
        @pl.when(n == 0)
        def _():
            x = x_ref[0].astype(jnp.float32)                       # (C, N)
            w = w_ref[...].astype(jnp.float32)                     # (Ctot, C)
            b = b_ref[...].astype(jnp.float32)                     # (Ctot, 1)
            qkv = jnp.dot(w, x, preferred_element_type=jnp.float32) + b
            q_s[...] = qkv[0:Cq, :].astype(jnp.bfloat16)
            k_s[...] = qkv[Cq:2 * Cq, :].astype(jnp.bfloat16)
            v_s[...] = qkv[2 * Cq:Ctot, :].astype(jnp.bfloat16)
            acc_s[...] = jnp.zeros_like(acc_s)

        # --- per n-tile: (TN, N) slab of energy^T, softmax, accumulate -------
        n0 = pl.multiple_of(n * TN, TN)
        k_tile = k_s[:, pl.ds(n0, TN)]                             # (Cq, TN) bf16
        v_tile = v_s[:, pl.ds(n0, TN)]                             # (C,  TN) bf16
        q_all = q_s[...]                                           # (Cq, N)  bf16

        # energy_t[t, m] = sum_c k[c, n0+t] * q[c, m]   (== energy[m, n0+t])
        energy_t = jax.lax.dot_general(
            k_tile, q_all, dimension_numbers=(((0,), (0,)), ((), ())),
            preferred_element_type=jnp.float32)                    # (TN, N) f32

        # torch Softmax(dim=1) over energy == softmax over the last axis of
        # energy^T; every row of the slab is complete -> plain row softmax.
        m = jnp.max(energy_t, axis=-1, keepdims=True)
        e = jnp.exp(energy_t - m)
        s = jnp.sum(e, axis=-1, keepdims=True)
        att_t = (e * pl.reciprocal(s, approx=True)).astype(jnp.bfloat16)

        # out[c, m] += sum_{t in tile} v[c, n0+t] * attention[m, n0+t]
        acc_s[...] += jnp.dot(v_tile, att_t,
                              preferred_element_type=jnp.float32)  # (C, N) f32

        # --- epilogue: gamma * out + residual ---------------------------------
        @pl.when(n == n_last)
        def _():
            gamma = gamma_ref[0]
            out = gamma * acc_s[...] + x_ref[0].astype(jnp.float32)
            o_ref[0] = out.astype(o_ref.dtype)

    return kernel


def self_attention_pallas(x, wq, bq, wk, bk, wv, bv, gamma, *, tile_n=None):
    B, C, H, W = x.shape
    N = H * W
    Cq = wq.shape[0]
    Ctot = 2 * Cq + C

    TN = tile_n if tile_n is not None else _choose_tile_n(N)
    assert N % TN == 0, f"tile_n={TN} must divide N={N}"
    n_tiles = N // TN

    xf = x.reshape(B, C, N)                                         # keep native dtype
    w_stack = jnp.concatenate(
        [jnp.asarray(wq), jnp.asarray(wk), jnp.asarray(wv)], axis=0)            # (Ctot, C)
    b_stack = jnp.concatenate(
        [jnp.asarray(bq), jnp.asarray(bk), jnp.asarray(bv)], axis=0).reshape(Ctot, 1)
    gamma1 = jnp.asarray(gamma, jnp.float32).reshape(1)

    # Rough VMEM estimate: x/out blocks (double-buffered) + q/k/v/acc scratch
    # + the (TN, N) softmax slab temporaries (~12 B/elem).
    itemsize = jnp.dtype(x.dtype).itemsize
    vmem_need = (4 * C * N * itemsize
                 + (2 * Cq + C) * N * 2 + C * N * 4
                 + TN * N * 12)
    compiler_kwargs = dict(dimension_semantics=("parallel", "arbitrary"))
    if vmem_need > (28 << 20):
        compiler_kwargs["vmem_limit_bytes"] = int(min(vmem_need + (8 << 20), 48 << 20))

    kernel = _make_kernel(C, Cq, N, TN)

    out = pl.pallas_call(
        kernel,
        out_shape=jax.ShapeDtypeStruct((B, C, N), x.dtype),
        grid_spec=pltpu.PrefetchScalarGridSpec(
            num_scalar_prefetch=0,
            grid=(B, n_tiles),
            in_specs=[
                pl.BlockSpec(memory_space=pltpu.MemorySpace.SMEM),   # gamma (scalar)
                pl.BlockSpec((1, C, N), lambda b, n: (b, 0, 0)),     # x: resident per image
                pl.BlockSpec((Ctot, C), lambda b, n: (0, 0)),        # stacked [Wq;Wk;Wv]
                pl.BlockSpec((Ctot, 1), lambda b, n: (0, 0)),        # stacked bias
            ],
            out_specs=pl.BlockSpec((1, C, N), lambda b, n: (b, 0, 0)),
            scratch_shapes=[
                pltpu.VMEM((Cq, N), jnp.bfloat16),   # q cache
                pltpu.VMEM((Cq, N), jnp.bfloat16),   # k cache
                pltpu.VMEM((C, N), jnp.bfloat16),    # v cache
                pltpu.VMEM((C, N), jnp.float32),     # output accumulator
            ],
        ),
        compiler_params=pltpu.CompilerParams(**compiler_kwargs),
    )(gamma1, xf, w_stack, b_stack)

    return out.reshape(B, C, H, W)


def ref_self_attention(x, wq, bq, wk, bk, wv, bv, gamma):
    """Pure-JAX reference replicating the PyTorch forward exactly (f32)."""
    B, C, H, W = x.shape
    N = H * W
    xf = x.reshape(B, C, N).astype(jnp.float32)
    q = jnp.einsum('oc,bcn->bon', wq, xf) + bq[None, :, None]   # (B, Cq, N)
    k = jnp.einsum('oc,bcn->bon', wk, xf) + bk[None, :, None]   # (B, Cq, N)
    v = jnp.einsum('oc,bcn->bon', wv, xf) + bv[None, :, None]   # (B, C,  N)
    energy = jnp.einsum('bcm,bcn->bmn', q, k)                   # (B, N, N)
    att = jax.nn.softmax(energy, axis=1)                        # torch Softmax(dim=1)
    out = jnp.einsum('bcn,bmn->bcm', v, att)                    # bmm(value, attention^T)
    return (gamma * out + xf).reshape(B, C, H, W)


if __name__ == "__main__":
    key = jax.random.PRNGKey(0)
    in_dims = 4
    B, C, H, W = 2, in_dims, 16, 16

    kx, kq, kbq, kk, kbk, kv, kbv = jax.random.split(key, 7)
    x = jax.random.normal(kx, (B, C, H, W), jnp.float32)
    wq = jax.random.normal(kq, (C // 2, C), jnp.float32) * 0.1
    bq = jax.random.normal(kbq, (C // 2,), jnp.float32) * 0.1
    wk = jax.random.normal(kk, (C // 2, C), jnp.float32) * 0.1
    bk = jax.random.normal(kbk, (C // 2,), jnp.float32) * 0.1
    wv = jax.random.normal(kv, (C, C), jnp.float32) * 0.1
    bv = jax.random.normal(kbv, (C,), jnp.float32) * 0.1
    # torch __init__ sets gamma = 0 (output == input); use a nonzero value so
    # the attention path is actually exercised.
    gamma = jnp.float32(0.5)

    ref = ref_self_attention(x, wq, bq, wk, bk, wv, bv, gamma)

    # Default path: TN == N (single n-tile for this small image).
    out = jax.block_until_ready(
        self_attention_pallas(x, wq, bq, wk, bk, wv, bv, gamma))
    assert out.shape == x.shape and out.dtype == x.dtype
    assert jnp.allclose(out, ref, atol=2e-2, rtol=2e-2), \
        f"max abs err {jnp.max(jnp.abs(out - ref))}"

    # Tiled path: force two n-tiles to exercise the accumulator / pl.when logic.
    out_tiled = jax.block_until_ready(
        self_attention_pallas(x, wq, bq, wk, bk, wv, bv, gamma, tile_n=128))
    assert jnp.allclose(out_tiled, ref, atol=2e-2, rtol=2e-2), \
        f"max abs err (tiled) {jnp.max(jnp.abs(out_tiled - ref))}"

    print("KERNEL_OK")
</pallas_src>

<mosaic_0001>
module attributes {stable_mosaic.version = 11 : i64} {
  func.func @kernel(%arg0: i32, %arg1: i32, %arg2: memref<1xf32, #tpu.memory_space<smem>>, %arg3: memref<1x4x256xf32, #tpu.memory_space<vmem>>, %arg4: memref<8x4xf32, #tpu.memory_space<vmem>>, %arg5: memref<8x1xf32, #tpu.memory_space<vmem>>, %arg6: memref<1x4x256xf32, #tpu.memory_space<vmem>>, %arg7: memref<2x256xbf16, #tpu.memory_space<vmem>>, %arg8: memref<2x256xbf16, #tpu.memory_space<vmem>>, %arg9: memref<4x256xbf16, #tpu.memory_space<vmem>>, %arg10: memref<4x256xf32, #tpu.memory_space<vmem>>) attributes {dimension_semantics = [#tpu.dimension_semantics<parallel>, #tpu.dimension_semantics<arbitrary>], iteration_bounds = array<i64: 2, 1>, scalar_prefetch = 0 : i64, scratch_operands = 4 : i64, tpu.core_type = #tpu.core_type<tc>, window_params = [{transform_indices = @transform_0, window_bounds = array<i64: 1>}, {transform_indices = @transform_1, window_bounds = array<i64: 1, 4, 256>}, {pipeline_mode = #tpu.pipeline_mode<synchronous>, transform_indices = @transform_2, window_bounds = array<i64: 8, 4>}, {pipeline_mode = #tpu.pipeline_mode<synchronous>, transform_indices = @transform_3, window_bounds = array<i64: 8, 1>}, {transform_indices = @transform_4, window_bounds = array<i64: 1, 4, 256>}]} {
    %c0_i32 = arith.constant 0 : i32
    %0 = arith.cmpi eq, %arg1, %c0_i32 : i32
    %1 = arith.extui %0 : i1 to i32
    %c0_i32_0 = arith.constant 0 : i32
    %2 = arith.cmpi ne, %1, %c0_i32_0 : i32
    scf.if %2 {
      %c0_13 = arith.constant 0 : index
      %c0_14 = arith.constant 0 : index
      %c0_15 = arith.constant 0 : index
      %29 = vector.load %arg3[%c0_13, %c0_14, %c0_15] : memref<1x4x256xf32, #tpu.memory_space<vmem>>, vector<1x4x256xf32>
      %30 = vector.shape_cast %29 : vector<1x4x256xf32> to vector<4x256xf32>
      %c0_16 = arith.constant 0 : index
      %c0_17 = arith.constant 0 : index
      %31 = vector.load %arg4[%c0_16, %c0_17] : memref<8x4xf32, #tpu.memory_space<vmem>>, vector<8x4xf32>
      %c0_18 = arith.constant 0 : index
      %c0_19 = arith.constant 0 : index
      %32 = vector.load %arg5[%c0_18, %c0_19] : memref<8x1xf32, #tpu.memory_space<vmem>>, vector<8x1xf32>
      %cst_20 = arith.constant dense<0.000000e+00> : vector<8x256xf32>
      %33 = tpu.matmul %31, %30, %cst_20 {dimension_numbers = #tpu.dot_dimension_numbers<[1], [0], [0], [1], [0, 0, 1, 1], [], []>} : vector<8x4xf32>, vector<4x256xf32>, vector<8x256xf32> -> vector<8x256xf32>
      %34 = vector.broadcast %32 : vector<8x1xf32> to vector<8x256xf32>
      %35 = arith.addf %33, %34 : vector<8x256xf32>
      %36 = vector.extract_strided_slice %35 {offsets = [0, 0], sizes = [2, 256], strides = [1, 1]} : vector<8x256xf32> to vector<2x256xf32>
      %37 = arith.truncf %36 : vector<2x256xf32> to vector<2x256xbf16>
      %c0_21 = arith.constant 0 : index
      %c0_22 = arith.constant 0 : index
      %38 = vector.load %arg7[%c0_21, %c0_22] : memref<2x256xbf16, #tpu.memory_space<vmem>>, vector<2x256xbf16>
      tpu.vector_store %arg7[%c0_21, %c0_22], %37 {strides = array<i32>} : memref<2x256xbf16, #tpu.memory_space<vmem>>, vector<2x256xbf16>,
      %39 = vector.extract_strided_slice %35 {offsets = [2, 0], sizes = [2, 256], strides = [1, 1]} : vector<8x256xf32> to vector<2x256xf32>
      %40 = arith.truncf %39 : vector<2x256xf32> to vector<2x256xbf16>
      %c0_23 = arith.constant 0 : index
      %c0_24 = arith.constant 0 : index
      %41 = vector.load %arg8[%c0_23, %c0_24] : memref<2x256xbf16, #tpu.memory_space<vmem>>, vector<2x256xbf16>
      tpu.vector_store %arg8[%c0_23, %c0_24], %40 {strides = array<i32>} : memref<2x256xbf16, #tpu.memory_space<vmem>>, vector<2x256xbf16>,
      %42 = vector.extract_strided_slice %35 {offsets = [4, 0], sizes = [4, 256], strides = [1, 1]} : vector<8x256xf32> to vector<4x256xf32>
      %43 = arith.truncf %42 : vector<4x256xf32> to vector<4x256xbf16>
      %c0_25 = arith.constant 0 : index
      %c0_26 = arith.constant 0 : index
      %44 = vector.load %arg9[%c0_25, %c0_26] : memref<4x256xbf16, #tpu.memory_space<vmem>>, vector<4x256xbf16>
      tpu.vector_store %arg9[%c0_25, %c0_26], %43 {strides = array<i32>} : memref<4x256xbf16, #tpu.memory_space<vmem>>, vector<4x256xbf16>,
      %cst_27 = arith.constant 0.000000e+00 : f32
      %45 = vector.broadcast %cst_27 : f32 to vector<4x256xf32>
      %c0_28 = arith.constant 0 : index
      %c0_29 = arith.constant 0 : index
      %46 = vector.load %arg10[%c0_28, %c0_29] : memref<4x256xf32, #tpu.memory_space<vmem>>, vector<4x256xf32>
      tpu.vector_store %arg10[%c0_28, %c0_29], %45 {strides = array<i32>} : memref<4x256xf32, #tpu.memory_space<vmem>>, vector<4x256xf32>,
    } else {
    }
    %c256_i32 = arith.constant 256 : i32
    %3 = arith.muli %arg1, %c256_i32 : i32
    %4 = tpu.assume_multiple %3, 256 : i32
    %c0 = arith.constant 0 : index
    %5 = arith.index_cast %4 : i32 to index
    %6 = vector.load %arg8[%c0, %5] : memref<2x256xbf16, #tpu.memory_space<vmem>>, vector<2x256xbf16>
    %c0_1 = arith.constant 0 : index
    %7 = arith.index_cast %4 : i32 to index
    %8 = vector.load %arg9[%c0_1, %7] : memref<4x256xbf16, #tpu.memory_space<vmem>>, vector<4x256xbf16>
    %c0_2 = arith.constant 0 : index
    %c0_3 = arith.constant 0 : index
    %9 = vector.load %arg7[%c0_2, %c0_3] : memref<2x256xbf16, #tpu.memory_space<vmem>>, vector<2x256xbf16>
    %cst = arith.constant dense<0.000000e+00> : vector<256x256xf32>
    %10 = tpu.matmul %6, %9, %cst {dimension_numbers = #tpu.dot_dimension_numbers<[0], [0], [1], [1], [0, 1, 1, 1], [], []>} : vector<2x256xbf16>, vector<2x256xbf16>, vector<256x256xf32> -> vector<256x256xf32>
    %cst_4 = arith.constant dense<0xFF800000> : vector<256xf32>
    %11 = vector.multi_reduction <maximumf>, %10, %cst_4 [1] : vector<256x256xf32> to vector<256xf32>
    %12 = vector.shape_cast %11 : vector<256xf32> to vector<256x1xf32>
    %13 = vector.broadcast %12 : vector<256x1xf32> to vector<256x256xf32>
    %14 = arith.subf %10, %13 : vector<256x256xf32>
    %15 = math.exp %14 : vector<256x256xf32>
    %cst_5 = arith.constant dense<0.000000e+00> : vector<256xf32>
    %16 = vector.multi_reduction <add>, %15, %cst_5 [1] : vector<256x256xf32> to vector<256xf32>
    %17 = vector.shape_cast %16 : vector<256xf32> to vector<256x1xf32>
    %18 = tpu.reciprocal %17 {approx = true} : vector<256x1xf32> -> vector<256x1xf32>
    %19 = vector.broadcast %18 : vector<256x1xf32> to vector<256x256xf32>
    %20 = arith.mulf %15, %19 : vector<256x256xf32>
    %21 = arith.truncf %20 : vector<256x256xf32> to vector<256x256xbf16>
    %c0_6 = arith.constant 0 : index
    %c0_7 = arith.constant 0 : index
    %22 = vector.load %arg10[%c0_6, %c0_7] : memref<4x256xf32, #tpu.memory_space<vmem>>, vector<4x256xf32>
    %cst_8 = arith.constant dense<0.000000e+00> : vector<4x256xf32>
    %23 = tpu.matmul %8, %21, %cst_8 {dimension_numbers = #tpu.dot_dimension_numbers<[1], [0], [0], [1], [0, 0, 1, 1], [], []>} : vector<4x256xbf16>, vector<256x256xbf16>, vector<4x256xf32> -> vector<4x256xf32>
    %24 = arith.addf %22, %23 : vector<4x256xf32>
    %c0_9 = arith.constant 0 : index
    %c0_10 = arith.constant 0 : index
    %25 = vector.load %arg10[%c0_9, %c0_10] : memref<4x256xf32, #tpu.memory_space<vmem>>, vector<4x256xf32>
    tpu.vector_store %arg10[%c0_9, %c0_10], %24 {strides = array<i32>} : memref<4x256xf32, #tpu.memory_space<vmem>>, vector<4x256xf32>,
    %c0_i32_11 = arith.constant 0 : i32
    %26 = arith.cmpi eq, %arg1, %c0_i32_11 : i32
    %27 = arith.extui %26 : i1 to i32
    %c0_i32_12 = arith.constant 0 : i32
    %28 = arith.cmpi ne, %27, %c0_i32_12 : i32
    scf.if %28 {
      %c0_13 = arith.constant 0 : index
      %29 = memref.load %arg2[%c0_13] : memref<1xf32, #tpu.memory_space<smem>>
      %c0_14 = arith.constant 0 : index
      %c0_15 = arith.constant 0 : index
      %30 = vector.load %arg10[%c0_14, %c0_15] : memref<4x256xf32, #tpu.memory_space<vmem>>, vector<4x256xf32>
      %31 = vector.broadcast %29 : f32 to vector<4x256xf32>
      %32 = arith.mulf %31, %30 : vector<4x256xf32>
      %c0_16 = arith.constant 0 : index
      %c0_17 = arith.constant 0 : index
      %c0_18 = arith.constant 0 : index
      %33 = vector.load %arg3[%c0_16, %c0_17, %c0_18] : memref<1x4x256xf32, #tpu.memory_space<vmem>>, vector<1x4x256xf32>
      %34 = vector.shape_cast %33 : vector<1x4x256xf32> to vector<4x256xf32>
      %35 = arith.addf %32, %34 : vector<4x256xf32>
      %c0_19 = arith.constant 0 : index
      %c0_20 = arith.constant 0 : index
      %c0_21 = arith.constant 0 : index
      %36 = vector.load %arg6[%c0_19, %c0_20, %c0_21] : memref<1x4x256xf32, #tpu.memory_space<vmem>>, vector<1x4x256xf32>
      %37 = vector.shape_cast %36 : vector<1x4x256xf32> to vector<4x256xf32>
      %38 = vector.shape_cast %35 : vector<4x256xf32> to vector<1x4x256xf32>
      tpu.vector_store %arg6[%c0_19, %c0_20, %c0_21], %38 {strides = array<i32>} : memref<1x4x256xf32, #tpu.memory_space<vmem>>, vector<1x4x256xf32>,
    } else {
    }
    return
  }
  func.func @transform_0(%arg0: i32, %arg1: i32) -> i32 {
    %c0_i32 = arith.constant 0 : i32
    %c0_i32_0 = arith.constant 0 : i32
    return %c0_i32 : i32
  }
  func.func @transform_1(%arg0: i32, %arg1: i32) -> (i32, i32, i32) {
    %c0_i32 = arith.constant 0 : i32
    %c0_i32_0 = arith.constant 0 : i32
    %c0_i32_1 = arith.constant 0 : i32
    return %arg0, %c0_i32, %c0_i32_0 : i32, i32, i32
  }
  func.func @transform_2(%arg0: i32, %arg1: i32) -> (i32, i32) {
    %c0_i32 = arith.constant 0 : i32
    %c0_i32_0 = arith.constant 0 : i32
    %c0_i32_1 = arith.constant 0 : i32
    return %c0_i32, %c0_i32_0 : i32, i32
  }
  func.func @transform_3(%arg0: i32, %arg1: i32) -> (i32, i32) {
    %c0_i32 = arith.constant 0 : i32
    %c0_i32_0 = arith.constant 0 : i32
    %c0_i32_1 = arith.constant 0 : i32
    return %c0_i32, %c0_i32_0 : i32, i32
  }
  func.func @transform_4(%arg0: i32, %arg1: i32) -> (i32, i32, i32) {
    %c0_i32 = arith.constant 0 : i32
    %c0_i32_0 = arith.constant 0 : i32
    %c0_i32_1 = arith.constant 0 : i32
    return %arg0, %c0_i32, %c0_i32_0 : i32, i32, i32
  }
}

</mosaic_0001>

<llo_original>
// kernel: tpu_custom_call.1
$region0: #{tpu_custom_call.1}
  #allocation0 [shape = 'u32[]', space=smem, size = 0x4, offset = 0x4, fixed_abs, tag = 'smem constant byte address 0x4 - core index']
  #allocation1 [shape = 'u32[72,128]{1,0:T(1,128)}', space=vmem, size = 0x9000, scoped, tag = 'internal scratch']
  #allocation2 [shape = 'bf16[2,256]{1,0:T(2,128)(2,1)}', space=vmem, size = 0x400, scoped, tag = 'scratch operand']
  #allocation3 [shape = 'bf16[2,256]{1,0:T(2,128)(2,1)}', space=vmem, size = 0x400, scoped, tag = 'scratch operand']
  #allocation4 [shape = 'bf16[4,256]{1,0:T(4,128)(2,1)}', space=vmem, size = 0x800, scoped, tag = 'scratch operand']
  #allocation5 [shape = 'f32[4,256]{1,0:T(4,128)}', space=vmem, size = 0x1000, scoped, tag = 'scratch operand']
  #allocation6 [shape = 'f32[1]{0:T(128)S(6)}', space=smem, size = 0x200, scoped, tag = 'scoped memory for tpu_custom_call.1']
  %s0 = inlined_call_operand.<no memory space> [shape: f32[1], index: 0, kind: input, shape index: {}]
  %s1 = inlined_call_operand.vmem [shape: f32[2,4,256], index: 1, kind: input, shape index: {}]
  %s2 = inlined_call_operand.vmem [shape: f32[8,4], index: 2, kind: input, shape index: {}]
  %s3 = inlined_call_operand.vmem [shape: f32[8,1], index: 3, kind: input, shape index: {}]
  %s4 = inlined_call_operand.hbm [shape: f32[2,4,256], index: 4, kind: output, shape index: {}]
  %s5 = sld [smem:[#allocation0]]
  $region57: #{tpu_custom_call.1} parent=0
    _
  %s7 = ssub.s32 1, %s5
  %s8 = scalar_select 0, %s7, %s5
  %9 = sst [smem:[#allocation6]] %s0
  $region1: #{tpu_custom_call.1} parent=0
    #allocation7 [shape = 'u8[8192]{0}', space=vmem, size = 0x2000, scoped, tag = 'output window, operand 0']
    #allocation8 [shape = 's32[2]{0}', space=sflag, size = 0x8, scoped, tag = 'scoped memory for tpu_custom_call.1']
    %10 = vsyncpa [#allocation8], 0
    %s11 = scalar_lea.sflag [#allocation8], 1
    %12 = vsyncpa %s11, 0
    loop: start=0, step=1, limit=4
    $region2: #{tpu_custom_call.1} parent=1 // loop_pre_header
      _
    $region3: #{tpu_custom_call.1} parent=1 // loop_header
      %s14 = sphi 0, %s18
      %p15 = scmp.ge.s32.totalorder %s14, 4
      %s21 = sphi 0, %s33
      %s22 = sphi 0, %s29
      %s23 = sphi 0, %s21
      %s24 = sphi 0, %s22
      %s25 = sphi 0, %s23
      %s26 = sphi 0, %s24
      %s34 = sphi 0, %s34
      %s36 = sphi 0, %s34
      %s37 = sphi 0, %s36
      %s51 = sphi 0, %s37
      %s57 = sphi 0, %s59
      %s60 = sphi 0, %s57
      %s61 = sphi 0, %s60
      %s77 = sphi 0, %s61
      %s81 = sphi 0, %s81
      %s83 = sphi 0, %s81
      %s84 = sphi 0, %s83
      %s98 = sphi 0, %s84
      %s102 = sphi 0, %s102
      %s104 = sphi 0, %s102
      %s105 = sphi 0, %s104
      %s119 = sphi 0, %s105
      %s125 = sphi 0, %s127
      %s128 = sphi 0, %s125
      %s129 = sphi 0, %s128
      %s145 = sphi 0, %s129
    $region4: #{tpu_custom_call.1} parent=1 // loop_header_branch
      %17 = sbr.rel (%p15) target = $region8
    $region5: #{tpu_custom_call.1} parent=1 // loop_body
      %s19 = ssub.s32 %s14, 1
      %s20 = ssub.s32 %s14, 2
      %s27 = sadd.s32 1, %s22
      %p28 = scmp.ge.s32.totalorder %s27, 1
      %s29 = scalar_select %p28, 0, %s27
      %s30 = sadd.s32 1, %s21
      %s31 = scalar_select %p28, %s30, %s21
      %p32 = scmp.ge.s32.totalorder %s31, 2
      %s33 = scalar_select %p32, 0, %s31
      %s35 = sadd.s32 %s34, 1
      %p38 = scmp.eq.s32.totalorder %s14, 1
      %p39 = scmp.ne.s32.totalorder %s34, %s36
      %p40 = scmp.eq.s32.totalorder %s14, 0
      %p41 = por %p39, %p40
      %p42 = scmp.ne.s32.totalorder %s34, %s36
      %p43 = scmp.eq.s32.totalorder %s19, 1
      %p44 = por %p42, %p43
      %p45 = scmp.ne.s32.totalorder %s36, %s37
      %p46 = scmp.eq.s32.totalorder %s19, 0
      %p47 = por %p45, %p46
      %p48 = scmp.ne.s32.totalorder %s36, %s37
      %p49 = scmp.eq.s32.totalorder %s20, 1
      %p50 = por %p48, %p49
      %p52 = scmp.ne.s32.totalorder %s37, %s51
      %p53 = scmp.eq.s32.totalorder %s20, 0
      %p54 = por %p52, %p53
      %s55 = ssub.s32 %s21, %s33
      %p56 = scmp.eq.s32.totalorder %s55, 0
      %s58 = sadd.s32 %s57, 1
      %s59 = scalar_select %p56, %s57, %s58
      %p62 = pneg %p56
      %p63 = scmp.eq.s32.totalorder %s14, 1
      %p64 = por %p62, %p63
      %p65 = scmp.ne.s32.totalorder %s57, %s60
      %p66 = scmp.eq.s32.totalorder %s14, 0
      %p67 = por %p65, %p66
      %p68 = scmp.ne.s32.totalorder %s57, %s60
      %p69 = scmp.eq.s32.totalorder %s19, 1
      %p70 = por %p68, %p69
      %p71 = scmp.ne.s32.totalorder %s60, %s61
      %p72 = scmp.eq.s32.totalorder %s19, 0
      %p73 = por %p71, %p72
      %p74 = scmp.ne.s32.totalorder %s60, %s61
      %p75 = scmp.eq.s32.totalorder %s20, 1
      %p76 = por %p74, %p75
      %p78 = scmp.ne.s32.totalorder %s61, %s77
      %p79 = scmp.eq.s32.totalorder %s20, 0
      %p80 = por %p78, %p79
      %s82 = sadd.s32 %s81, 1
      %p85 = scmp.eq.s32.totalorder %s14, 1
      %p86 = scmp.ne.s32.totalorder %s81, %s83
      %p87 = scmp.eq.s32.totalorder %s14, 0
      %p88 = por %p86, %p87
      %p89 = scmp.ne.s32.totalorder %s81, %s83
      %p90 = scmp.eq.s32.totalorder %s19, 1
      %p91 = por %p89, %p90
      %p92 = scmp.ne.s32.totalorder %s83, %s84
      %p93 = scmp.eq.s32.totalorder %s19, 0
      %p94 = por %p92, %p93
      %p95 = scmp.ne.s32.totalorder %s83, %s84
      %p96 = scmp.eq.s32.totalorder %s20, 1
      %p97 = por %p95, %p96
      %p99 = scmp.ne.s32.totalorder %s84, %s98
      %p100 = scmp.eq.s32.totalorder %s20, 0
      %p101 = por %p99, %p100
      %s103 = sadd.s32 %s102, 1
      %p106 = scmp.eq.s32.totalorder %s14, 1
      %p107 = scmp.ne.s32.totalorder %s102, %s104
      %p108 = scmp.eq.s32.totalorder %s14, 0
      %p109 = por %p107, %p108
      %p110 = scmp.ne.s32.totalorder %s102, %s104
      %p111 = scmp.eq.s32.totalorder %s19, 1
      %p112 = por %p110, %p111
      %p113 = scmp.ne.s32.totalorder %s104, %s105
      %p114 = scmp.eq.s32.totalorder %s19, 0
      %p115 = por %p113, %p114
      %p116 = scmp.ne.s32.totalorder %s104, %s105
      %p117 = scmp.eq.s32.totalorder %s20, 1
      %p118 = por %p116, %p117
      %p120 = scmp.ne.s32.totalorder %s105, %s119
      %p121 = scmp.eq.s32.totalorder %s20, 0
      %p122 = por %p120, %p121
      %s123 = ssub.s32 %s21, %s33
      %p124 = scmp.eq.s32.totalorder %s123, 0
      %s126 = sadd.s32 %s125, 1
      %s127 = scalar_select %p124, %s125, %s126
      %p130 = pneg %p124
      %p131 = scmp.eq.s32.totalorder %s14, 1
      %p132 = por %p130, %p131
      %p133 = scmp.ne.s32.totalorder %s125, %s128
      %p134 = scmp.eq.s32.totalorder %s14, 0
      %p135 = por %p133, %p134
      %p136 = scmp.ne.s32.totalorder %s125, %s128
      %p137 = scmp.eq.s32.totalorder %s19, 1
      %p138 = por %p136, %p137
      %p139 = scmp.ne.s32.totalorder %s128, %s129
      %p140 = scmp.eq.s32.totalorder %s19, 0
      %p141 = por %p139, %p140
      %p142 = scmp.ne.s32.totalorder %s128, %s129
      %p143 = scmp.eq.s32.totalorder %s20, 1
      %p144 = por %p142, %p143
      %p146 = scmp.ne.s32.totalorder %s129, %s145
      %p147 = scmp.eq.s32.totalorder %s20, 0
      %p148 = por %p146, %p147
      %p149 = scmp.le.s32.totalorder 1, %s14
      %p150 = scmp.lt.s32.totalorder %s14, 3
      %p151 = pnand %p149, %p150
      %p152 = pneg %p151
      // Predicated region
      $region9: #{tpu_custom_call.1} parent=5 // pred_check
        _
      $region10: #{tpu_custom_call.1} parent=5 // pred_check_branch
        %154 = sbr.rel (%p151) target = $region12
      $region11: #{tpu_custom_call.1} parent=5 // pred_region
        %s155 = ssub.s32 %s14, 1
        // Predicated region
        $region13: #{tpu_custom_call.1} parent=11 // pred_check
          %p156 = pneg %p47
        $region14: #{tpu_custom_call.1} parent=11 // pred_check_branch
          %158 = sbr.rel (%p156) target = $region16
        $region15: #{tpu_custom_call.1} parent=11 // pred_region
          _
        $region16: #{tpu_custom_call.1} parent=11 // pred_fallthru
          _
        // Predicated region
        $region17: #{tpu_custom_call.1} parent=11 // pred_check
          %p159 = pneg %p94
        $region18: #{tpu_custom_call.1} parent=11 // pred_check_branch
          %161 = sbr.rel (%p159) target = $region20
        $region19: #{tpu_custom_call.1} parent=11 // pred_region
          _
        $region20: #{tpu_custom_call.1} parent=11 // pred_fallthru
          _
        // Predicated region
        $region21: #{tpu_custom_call.1} parent=11 // pred_check
          %p162 = pneg %p115
        $region22: #{tpu_custom_call.1} parent=11 // pred_check_branch
          %164 = sbr.rel (%p162) target = $region24
        $region23: #{tpu_custom_call.1} parent=11 // pred_region
          _
        $region24: #{tpu_custom_call.1} parent=11 // pred_fallthru
          _
      $region12: #{tpu_custom_call.1} parent=5 // pred_fallthru
        _
      %p165 = scmp.lt.s32.totalorder %s14, 2
      // Predicated region
      $region25: #{tpu_custom_call.1} parent=5 // pred_check
        %p166 = pneg %p165
      $region26: #{tpu_custom_call.1} parent=5 // pred_check_branch
        %168 = sbr.rel (%p166) target = $region28
      $region27: #{tpu_custom_call.1} parent=5 // pred_region
        // Predicated region
        $region29: #{tpu_custom_call.1} parent=27 // pred_check
          %p169 = pneg %p67
        $region30: #{tpu_custom_call.1} parent=27 // pred_check_branch
          %171 = sbr.rel (%p169) target = $region32
        $region31: #{tpu_custom_call.1} parent=27 // pred_region
          %p172 = scmp.lt.s32.totalorder %s21, 1
          %s173 = scalar_select %p172, %s21, 1
          %s174 = smul.addr %s173, 2
          %s175 = smul.addr %s174, 4
          %s176 = scalar_lea.vmem %s1, %s175
        $region32: #{tpu_custom_call.1} parent=27 // pred_fallthru
          _
      $region28: #{tpu_custom_call.1} parent=5 // pred_fallthru
        _
      %p177 = scmp.le.s32.totalorder 1, %s14
      %p178 = scmp.lt.s32.totalorder %s14, 3
      %p179 = pnand %p177, %p178
      %p180 = pneg %p179
      // Predicated region
      $region33: #{tpu_custom_call.1} parent=5 // pred_check
        _
      $region34: #{tpu_custom_call.1} parent=5 // pred_check_branch
        %182 = sbr.rel (%p179) target = $region36
      $region35: #{tpu_custom_call.1} parent=5 // pred_region
        %s183 = ssub.s32 %s14, 1
        %p184 = pneg %p47
        %p185 = pneg %p44
        %p186 = scmp.lt.s32.totalorder %s23, 1
        %s187 = scalar_select %p186, %s23, 1
        %s188 = smul.addr %s187, 2
        %s189 = smul.addr %s188, 4
        %s190 = scalar_lea.vmem %s1, %s189
        %p191 = pneg %p73
        %p192 = pneg %p70
        %p193 = pneg %p94
        %p194 = pneg %p91
        %p195 = pneg %p115
        %p196 = pneg %p112
        %p197 = pneg %p141
        %p198 = pneg %p138
        %s199 = sand.u32 %s128, 1
        %s200 = scalar_lea.sflag [#allocation8], %s199
        %s201 = sand.u32 %s128, 1
        %s202 = smul.addr %s201, 8
        %s203 = scalar_lea.vmem [#allocation7], %s202
        %p204 = scmp.lt.s32.totalorder %s23, 1
        %s205 = scalar_select %p204, %s23, 1
        %s206 = smul.addr %s205, 2
        %s207 = smul.addr %s206, 4
        %s208 = scalar_lea.vmem %s1, %s207
        %p210 = scmp.eq.s32.totalorder %s24, 0
        // Predicated region
        $region37: #{tpu_custom_call.1} parent=35 // pred_check
          %p211 = pneg %p210
        $region38: #{tpu_custom_call.1} parent=35 // pred_check_branch
          %213 = sbr.rel (%p211) target = $region40
        $region39: #{tpu_custom_call.1} parent=35 // pred_region
          %v214 = vld [vmem:[%s208] sm:$0xff]
          %v215 = vld [vmem:[%s2] sm:$0xff]
          %v216 = vld [vmem:[%s3] sm:$0xff]
          %218 = vset.pattern.permute.xlu0 0
          %219 = vperm.xlu0 %218, %v216
          %v220 = vpop.permute.xlu0 %219
          %223 = vst [vmem:[#allocation1] ss:$2 sm:$0xff] %v214
          %v224 = vld.sshfl [vmem:[#allocation1] sm:$0xff pattern:$0x75316420]
          %v225 = vld.sshfl [vmem:[#allocation1 + $0x8] sm:$0xff pattern:$0x75316420]
          %vm226 = vcmask 31744
          %v228 = vsel %vm226, %v215, 0
          %vm230 = vcmask 1043456
          %v231 = vsel %vm230, %v224, 0
          %v233 = vsel %vm230, %v225, 0
          %235 = vmatpush.msra.mxu0 0.0
          %236 = vmatpush.msra.mxu0 0.0
          %237 = vmatpush.msra.mxu0 0.0
          %238 = vmatpush.msra.mxu0 0.0
          %239 = vmatpush.msra.mxu0 0.0
          %240 = vmatpush.msra.mxu0 0.0
          %241 = vmatpush.msra.mxu0 0.0
          %242 = vmatpush.msra.mxu0 0.0
          %243 = vmatpush.msra.mxu0 0.0
          %244 = vmatpush.msra.mxu0 0.0
          %245 = vmatpush.msra.mxu0 0.0
          %246 = vmatpush.msra.mxu0 0.0
          %247 = vmatpush.msra.mxu0 0.0
          %248 = vmatpush.msra.mxu0 0.0
          %249 = vmatpush.msra.mxu0 0.0
          %250 = vmatpush.msra.mxu0 %v231
          %251 = vmatmul.f32.gmra.mxu0 %v228
          %v252 = vpop.f32.mrf.mxu0
          %v253 = vadd.f32 %v220, %v252
          %254 = vdwg.mxu0
          %255 = vmatpush.msra.mxu0 0.0
          %256 = vmatpush.msra.mxu0 0.0
          %257 = vmatpush.msra.mxu0 0.0
          %258 = vmatpush.msra.mxu0 0.0
          %259 = vmatpush.msra.mxu0 0.0
          %260 = vmatpush.msra.mxu0 0.0
          %261 = vmatpush.msra.mxu0 0.0
          %262 = vmatpush.msra.mxu0 0.0
          %263 = vmatpush.msra.mxu0 0.0
          %264 = vmatpush.msra.mxu0 0.0
          %265 = vmatpush.msra.mxu0 0.0
          %266 = vmatpush.msra.mxu0 0.0
          %267 = vmatpush.msra.mxu0 0.0
          %268 = vmatpush.msra.mxu0 0.0
          %269 = vmatpush.msra.mxu0 0.0
          %270 = vmatpush.msra.mxu0 %v233
          %271 = vmatmul.f32.gmra.mxu0 %v228
          %v272 = vpop.f32.mrf.mxu0
          %v273 = vadd.f32 %v220, %v272
          %274 = vdwg.mxu0
          %v275 = vpack.c.bf16 %v273, %v253
          %v277 = vrot.slane %v275, 3
          %vm278 = vcmask 1040384
          %v281 = vsel %vm278, %v275, %v277
          %283 = vst [vmem:[#allocation2] sm:$0x3] %v281
          %284 = vst [vmem:[#allocation1] sm:$0xff] %v275
          %s285 = scalar_lea.vmem [#allocation1], 1
          %v286 = vld [vmem:[%s285] ss:$4 sm:$0xff]
          %288 = vst [vmem:[#allocation3] sm:$0x3] %v286
          %289 = vst.sshfl [vmem:[#allocation1] sm:$0xff pattern:$0x75643120] %v275
          %s290 = scalar_lea.vmem [#allocation1], 1
          %v291 = vld [vmem:[%s290] ss:$2 sm:$0xff]
          %293 = vst [vmem:[#allocation4] sm:$0xf] %v291
          %294 = vst [vmem:[#allocation5] sm:$0xff] 0.0
        $region40: #{tpu_custom_call.1} parent=35 // pred_fallthru
          _
        %s295 = smul.u32 %s24, 256
        %s296 = sshra.s32 %s295, 7
        %s297 = sand.u32 %s295, 127
        %s298 = scalar_lea.vmem [#allocation3], %s296
        %v299 = vld [vmem:[%s298] sm:$0x3]
        %s300 = smul.addr %s296, 2
        %s301 = scalar_lea.vmem [#allocation4], %s300
        %v302 = vld [vmem:[%s301] sm:$0xf]
        %v303 = vld [vmem:[#allocation2] sm:$0x3]
        %305 = vst [vmem:[#allocation1] ss:$9 sm:$0xff] %v299
        %v306 = vld [vmem:[#allocation1] sm:$0xff]
        %v307 = vld [vmem:[#allocation1 + $0x9] sm:$0xff]
        %310 = vxpose.binary.xlu0.c.b16.start [1/16] %v307, %v306, 128
        %311 = vxpose.binary.xlu0.c.b16.cont [2/16] 0, 0, 128
        %312 = vxpose.binary.xlu0.c.b16.cont [3/16] 0, 0, 128
        %313 = vxpose.binary.xlu0.c.b16.cont [4/16] 0, 0, 128
        %314 = vxpose.binary.xlu0.c.b16.cont [5/16] 0, 0, 128
        %315 = vxpose.binary.xlu0.c.b16.cont [6/16] 0, 0, 128
        %316 = vxpose.binary.xlu0.c.b16.cont [7/16] 0, 0, 128
        %317 = vxpose.binary.xlu0.c.b16.end [8/16] 0, 0, 128
        %v318 = vpop.trf.xlu0
        %v319 = vpop.trf.xlu0
        %v320 = vpop.trf.xlu0
        %v321 = vpop.trf.xlu0
        %v322 = vpop.trf.xlu0
        %v323 = vpop.trf.xlu0
        %v324 = vpop.trf.xlu0
        %v325 = vpop.trf.xlu0
        %v326 = vpop.trf.xlu0
        %v327 = vpop.trf.xlu0
        %v328 = vpop.trf.xlu0
        %v329 = vpop.trf.xlu0
        %v330 = vpop.trf.xlu0
        %v331 = vpop.trf.xlu0
        %v332 = vpop.trf.xlu0
        %v333 = vpop.trf.xlu0
        %335 = vst [vmem:[#allocation1] ss:$9 sm:$0xff] %v303
        %v336 = vld [vmem:[#allocation1] sm:$0xff]
        %v337 = vld [vmem:[#allocation1 + $0x9] sm:$0xff]
        %vm338 = vcmask 15360
        %v340 = vsel %vm338, %v318, 0
        %v343 = vsel %vm338, %v320, 0
        %v346 = vsel %vm338, %v322, 0
        %v349 = vsel %vm338, %v324, 0
        %v352 = vsel %vm338, %v326, 0
        %v355 = vsel %vm338, %v328, 0
        %v358 = vsel %vm338, %v330, 0
        %v361 = vsel %vm338, %v332, 0
        %v364 = vsel %vm338, %v319, 0
        %v367 = vsel %vm338, %v321, 0
        %v370 = vsel %vm338, %v323, 0
        %v373 = vsel %vm338, %v325, 0
        %v376 = vsel %vm338, %v327, 0
        %v379 = vsel %vm338, %v329, 0
        %v382 = vsel %vm338, %v331, 0
        %v385 = vsel %vm338, %v333, 0
        %vm387 = vcmask 1040384
        %v388 = vsel %vm387, %v336, 0
        %v390 = vsel %vm387, %v337, 0
        %392 = vmatpush.bf16.msra.mxu0 0
        %393 = vmatpush.bf16.msra.mxu0 0
        %394 = vmatpush.bf16.msra.mxu0 0
        %395 = vmatpush.bf16.msra.mxu0 0
        %396 = vmatpush.bf16.msra.mxu0 0
        %397 = vmatpush.bf16.msra.mxu0 0
        %398 = vmatpush.bf16.msra.mxu0 0
        %399 = vmatpush.bf16.msra.mxu0 %v388
        %400 = vmatmul.bf16.gmra.mxu0 %v340
        %v401 = vpop.f32.mrf.mxu0
        %v402 = vadd.f32 0.0, %v401
        %v403 = vpop.f32.mrf.mxu0
        %v404 = vadd.f32 0.0, %v403
        %405 = vmatmul.bf16.gmra.mxu0 %v343
        %v406 = vpop.f32.mrf.mxu0
        %v407 = vadd.f32 0.0, %v406
        %v408 = vpop.f32.mrf.mxu0
        %v409 = vadd.f32 0.0, %v408
        %410 = vmatmul.bf16.gmra.mxu0 %v346
        %v411 = vpop.f32.mrf.mxu0
        %v412 = vadd.f32 0.0, %v411
        %v413 = vpop.f32.mrf.mxu0
        %v414 = vadd.f32 0.0, %v413
        %415 = vmatmul.bf16.gmra.mxu0 %v349
        %v416 = vpop.f32.mrf.mxu0
        %v417 = vadd.f32 0.0, %v416
        %v418 = vpop.f32.mrf.mxu0
        %v419 = vadd.f32 0.0, %v418
        %420 = vmatmul.bf16.gmra.mxu0 %v352
        %v421 = vpop.f32.mrf.mxu0
        %v422 = vadd.f32 0.0, %v421
        %v423 = vpop.f32.mrf.mxu0
        %v424 = vadd.f32 0.0, %v423
        %425 = vmatmul.bf16.gmra.mxu0 %v355
        %v426 = vpop.f32.mrf.mxu0
        %v427 = vadd.f32 0.0, %v426
        %v428 = vpop.f32.mrf.mxu0
        %v429 = vadd.f32 0.0, %v428
        %430 = vmatmul.bf16.gmra.mxu0 %v358
        %v431 = vpop.f32.mrf.mxu0
        %v432 = vadd.f32 0.0, %v431
        %v433 = vpop.f32.mrf.mxu0
        %v434 = vadd.f32 0.0, %v433
        %435 = vmatmul.bf16.gmra.mxu0 %v361
        %v436 = vpop.f32.mrf.mxu0
        %v437 = vadd.f32 0.0, %v436
        %v438 = vpop.f32.mrf.mxu0
        %v439 = vadd.f32 0.0, %v438
        %440 = vmatmul.bf16.gmra.mxu0 %v364
        %v441 = vpop.f32.mrf.mxu0
        %v442 = vadd.f32 0.0, %v441
        %v443 = vpop.f32.mrf.mxu0
        %v444 = vadd.f32 0.0, %v443
        %445 = vmatmul.bf16.gmra.mxu0 %v367
        %v446 = vpop.f32.mrf.mxu0
        %v447 = vadd.f32 0.0, %v446
        %v448 = vpop.f32.mrf.mxu0
        %v449 = vadd.f32 0.0, %v448
        %450 = vmatmul.bf16.gmra.mxu0 %v370
        %v451 = vpop.f32.mrf.mxu0
        %v452 = vadd.f32 0.0, %v451
        %v453 = vpop.f32.mrf.mxu0
        %v454 = vadd.f32 0.0, %v453
        %455 = vmatmul.bf16.gmra.mxu0 %v373
        %v456 = vpop.f32.mrf.mxu0
        %v457 = vadd.f32 0.0, %v456
        %v458 = vpop.f32.mrf.mxu0
        %v459 = vadd.f32 0.0, %v458
        %460 = vmatmul.bf16.gmra.mxu0 %v376
        %v461 = vpop.f32.mrf.mxu0
        %v462 = vadd.f32 0.0, %v461
        %v463 = vpop.f32.mrf.mxu0
        %v464 = vadd.f32 0.0, %v463
        %465 = vmatmul.bf16.gmra.mxu0 %v379
        %v466 = vpop.f32.mrf.mxu0
        %v467 = vadd.f32 0.0, %v466
        %v468 = vpop.f32.mrf.mxu0
        %v469 = vadd.f32 0.0, %v468
        %470 = vmatmul.bf16.gmra.mxu0 %v382
        %v471 = vpop.f32.mrf.mxu0
        %v472 = vadd.f32 0.0, %v471
        %v473 = vpop.f32.mrf.mxu0
        %v474 = vadd.f32 0.0, %v473
        %475 = vmatmul.bf16.gmra.mxu0 %v385
        %v476 = vpop.f32.mrf.mxu0
        %v477 = vadd.f32 0.0, %v476
        %v478 = vpop.f32.mrf.mxu0
        %v479 = vadd.f32 0.0, %v478
        %480 = vdwg.mxu0
        %481 = vmatpush.bf16.msra.mxu0 0
        %482 = vmatpush.bf16.msra.mxu0 0
        %483 = vmatpush.bf16.msra.mxu0 0
        %484 = vmatpush.bf16.msra.mxu0 0
        %485 = vmatpush.bf16.msra.mxu0 0
        %486 = vmatpush.bf16.msra.mxu0 0
        %487 = vmatpush.bf16.msra.mxu0 0
        %488 = vmatpush.bf16.msra.mxu0 %v390
        %489 = vmatmul.bf16.gmra.mxu0 %v340
        %v490 = vpop.f32.mrf.mxu0
        %v491 = vadd.f32 0.0, %v490
        %v492 = vpop.f32.mrf.mxu0
        %v493 = vadd.f32 0.0, %v492
        %494 = vmatmul.bf16.gmra.mxu0 %v343
        %v495 = vpop.f32.mrf.mxu0
        %v496 = vadd.f32 0.0, %v495
        %v497 = vpop.f32.mrf.mxu0
        %v498 = vadd.f32 0.0, %v497
        %499 = vmatmul.bf16.gmra.mxu0 %v346
        %v500 = vpop.f32.mrf.mxu0
        %v501 = vadd.f32 0.0, %v500
        %v502 = vpop.f32.mrf.mxu0
        %v503 = vadd.f32 0.0, %v502
        %504 = vmatmul.bf16.gmra.mxu0 %v349
        %v505 = vpop.f32.mrf.mxu0
        %v506 = vadd.f32 0.0, %v505
        %v507 = vpop.f32.mrf.mxu0
        %v508 = vadd.f32 0.0, %v507
        %509 = vmatmul.bf16.gmra.mxu0 %v352
        %v510 = vpop.f32.mrf.mxu0
        %v511 = vadd.f32 0.0, %v510
        %v512 = vpop.f32.mrf.mxu0
        %v513 = vadd.f32 0.0, %v512
        %514 = vmatmul.bf16.gmra.mxu0 %v355
        %v515 = vpop.f32.mrf.mxu0
        %v516 = vadd.f32 0.0, %v515
        %v517 = vpop.f32.mrf.mxu0
        %v518 = vadd.f32 0.0, %v517
        %519 = vmatmul.bf16.gmra.mxu0 %v358
        %v520 = vpop.f32.mrf.mxu0
        %v521 = vadd.f32 0.0, %v520
        %v522 = vpop.f32.mrf.mxu0
        %v523 = vadd.f32 0.0, %v522
        %524 = vmatmul.bf16.gmra.mxu0 %v361
        %v525 = vpop.f32.mrf.mxu0
        %v526 = vadd.f32 0.0, %v525
        %v527 = vpop.f32.mrf.mxu0
        %v528 = vadd.f32 0.0, %v527
        %529 = vmatmul.bf16.gmra.mxu0 %v364
        %v530 = vpop.f32.mrf.mxu0
        %v531 = vadd.f32 0.0, %v530
        %v532 = vpop.f32.mrf.mxu0
        %v533 = vadd.f32 0.0, %v532
        %534 = vmatmul.bf16.gmra.mxu0 %v367
        %v535 = vpop.f32.mrf.mxu0
        %v536 = vadd.f32 0.0, %v535
        %v537 = vpop.f32.mrf.mxu0
        %v538 = vadd.f32 0.0, %v537
        %539 = vmatmul.bf16.gmra.mxu0 %v370
        %v540 = vpop.f32.mrf.mxu0
        %v541 = vadd.f32 0.0, %v540
        %v542 = vpop.f32.mrf.mxu0
        %v543 = vadd.f32 0.0, %v542
        %544 = vmatmul.bf16.gmra.mxu0 %v373
        %v545 = vpop.f32.mrf.mxu0
        %v546 = vadd.f32 0.0, %v545
        %v547 = vpop.f32.mrf.mxu0
        %v548 = vadd.f32 0.0, %v547
        %549 = vmatmul.bf16.gmra.mxu0 %v376
        %v550 = vpop.f32.mrf.mxu0
        %v551 = vadd.f32 0.0, %v550
        %v552 = vpop.f32.mrf.mxu0
        %v553 = vadd.f32 0.0, %v552
        %554 = vmatmul.bf16.gmra.mxu0 %v379
        %v555 = vpop.f32.mrf.mxu0
        %v556 = vadd.f32 0.0, %v555
        %v557 = vpop.f32.mrf.mxu0
        %v558 = vadd.f32 0.0, %v557
        %559 = vmatmul.bf16.gmra.mxu0 %v382
        %v560 = vpop.f32.mrf.mxu0
        %v561 = vadd.f32 0.0, %v560
        %v562 = vpop.f32.mrf.mxu0
        %v563 = vadd.f32 0.0, %v562
        %564 = vmatmul.bf16.gmra.mxu0 %v385
        %v565 = vpop.f32.mrf.mxu0
        %v566 = vadd.f32 0.0, %v565
        %v567 = vpop.f32.mrf.mxu0
        %v568 = vadd.f32 0.0, %v567
        %569 = vdwg.mxu0
        %v570 = vmax.f32 %v402, %v491
        %571 = vmax.xlane.f32.xlu0 %v570
        %v572 = vpop.xlane.xlu0 %571
        %v573 = vmax.f32 %v404, %v493
        %574 = vmax.xlane.f32.xlu0 %v573
        %v575 = vpop.xlane.xlu0 %574
        %v576 = vmax.f32 %v407, %v496
        %577 = vmax.xlane.f32.xlu0 %v576
        %v578 = vpop.xlane.xlu0 %577
        %v579 = vmax.f32 %v409, %v498
        %580 = vmax.xlane.f32.xlu0 %v579
        %v581 = vpop.xlane.xlu0 %580
        %v582 = vmax.f32 %v412, %v501
        %583 = vmax.xlane.f32.xlu0 %v582
        %v584 = vpop.xlane.xlu0 %583
        %v585 = vmax.f32 %v414, %v503
        %586 = vmax.xlane.f32.xlu0 %v585
        %v587 = vpop.xlane.xlu0 %586
        %v588 = vmax.f32 %v417, %v506
        %589 = vmax.xlane.f32.xlu0 %v588
        %v590 = vpop.xlane.xlu0 %589
        %v591 = vmax.f32 %v419, %v508
        %592 = vmax.xlane.f32.xlu0 %v591
        %v593 = vpop.xlane.xlu0 %592
        %v594 = vmax.f32 %v422, %v511
        %595 = vmax.xlane.f32.xlu0 %v594
        %v596 = vpop.xlane.xlu0 %595
        %v597 = vmax.f32 %v424, %v513
        %598 = vmax.xlane.f32.xlu0 %v597
        %v599 = vpop.xlane.xlu0 %598
        %v600 = vmax.f32 %v427, %v516
        %601 = vmax.xlane.f32.xlu0 %v600
        %v602 = vpop.xlane.xlu0 %601
        %v603 = vmax.f32 %v429, %v518
        %604 = vmax.xlane.f32.xlu0 %v603
        %v605 = vpop.xlane.xlu0 %604
        %v606 = vmax.f32 %v432, %v521
        %607 = vmax.xlane.f32.xlu0 %v606
        %v608 = vpop.xlane.xlu0 %607
        %v609 = vmax.f32 %v434, %v523
        %610 = vmax.xlane.f32.xlu0 %v609
        %v611 = vpop.xlane.xlu0 %610
        %v612 = vmax.f32 %v437, %v526
        %613 = vmax.xlane.f32.xlu0 %v612
        %v614 = vpop.xlane.xlu0 %613
        %v615 = vmax.f32 %v439, %v528
        %616 = vmax.xlane.f32.xlu0 %v615
        %v617 = vpop.xlane.xlu0 %616
        %v618 = vmax.f32 %v442, %v531
        %619 = vmax.xlane.f32.xlu0 %v618
        %v620 = vpop.xlane.xlu0 %619
        %v621 = vmax.f32 %v444, %v533
        %622 = vmax.xlane.f32.xlu0 %v621
        %v623 = vpop.xlane.xlu0 %622
        %v624 = vmax.f32 %v447, %v536
        %625 = vmax.xlane.f32.xlu0 %v624
        %v626 = vpop.xlane.xlu0 %625
        %v627 = vmax.f32 %v449, %v538
        %628 = vmax.xlane.f32.xlu0 %v627
        %v629 = vpop.xlane.xlu0 %628
        %v630 = vmax.f32 %v452, %v541
        %631 = vmax.xlane.f32.xlu0 %v630
        %v632 = vpop.xlane.xlu0 %631
        %v633 = vmax.f32 %v454, %v543
        %634 = vmax.xlane.f32.xlu0 %v633
        %v635 = vpop.xlane.xlu0 %634
        %v636 = vmax.f32 %v457, %v546
        %637 = vmax.xlane.f32.xlu0 %v636
        %v638 = vpop.xlane.xlu0 %637
        %v639 = vmax.f32 %v459, %v548
        %640 = vmax.xlane.f32.xlu0 %v639
        %v641 = vpop.xlane.xlu0 %640
        %v642 = vmax.f32 %v462, %v551
        %643 = vmax.xlane.f32.xlu0 %v642
        %v644 = vpop.xlane.xlu0 %643
        %v645 = vmax.f32 %v464, %v553
        %646 = vmax.xlane.f32.xlu0 %v645
        %v647 = vpop.xlane.xlu0 %646
        %v648 = vmax.f32 %v467, %v556
        %649 = vmax.xlane.f32.xlu0 %v648
        %v650 = vpop.xlane.xlu0 %649
        %v651 = vmax.f32 %v469, %v558
        %652 = vmax.xlane.f32.xlu0 %v651
        %v653 = vpop.xlane.xlu0 %652
        %v654 = vmax.f32 %v472, %v561
        %655 = vmax.xlane.f32.xlu0 %v654
        %v656 = vpop.xlane.xlu0 %655
        %v657 = vmax.f32 %v474, %v563
        %658 = vmax.xlane.f32.xlu0 %v657
        %v659 = vpop.xlane.xlu0 %658
        %v660 = vmax.f32 %v477, %v566
        %661 = vmax.xlane.f32.xlu0 %v660
        %v662 = vpop.xlane.xlu0 %661
        %v663 = vmax.f32 %v479, %v568
        %664 = vmax.xlane.f32.xlu0 %v663
        %v665 = vpop.xlane.xlu0 %664
        %v666 = vsub.f32 %v402, %v572
        %v667 = vsub.f32 %v491, %v572
        %v668 = vsub.f32 %v404, %v575
        %v669 = vsub.f32 %v493, %v575
        %v670 = vsub.f32 %v407, %v578
        %v671 = vsub.f32 %v496, %v578
        %v672 = vsub.f32 %v409, %v581
        %v673 = vsub.f32 %v498, %v581
        %v674 = vsub.f32 %v412, %v584
        %v675 = vsub.f32 %v501, %v584
        %v676 = vsub.f32 %v414, %v587
        %v677 = vsub.f32 %v503, %v587
        %v678 = vsub.f32 %v417, %v590
        %v679 = vsub.f32 %v506, %v590
        %v680 = vsub.f32 %v419, %v593
        %v681 = vsub.f32 %v508, %v593
        %v682 = vsub.f32 %v422, %v596
        %v683 = vsub.f32 %v511, %v596
        %v684 = vsub.f32 %v424, %v599
        %v685 = vsub.f32 %v513, %v599
        %v686 = vsub.f32 %v427, %v602
        %v687 = vsub.f32 %v516, %v602
        %v688 = vsub.f32 %v429, %v605
        %v689 = vsub.f32 %v518, %v605
        %v690 = vsub.f32 %v432, %v608
        %v691 = vsub.f32 %v521, %v608
        %v692 = vsub.f32 %v434, %v611
        %v693 = vsub.f32 %v523, %v611
        %v694 = vsub.f32 %v437, %v614
        %v695 = vsub.f32 %v526, %v614
        %v696 = vsub.f32 %v439, %v617
        %v697 = vsub.f32 %v528, %v617
        %v698 = vsub.f32 %v442, %v620
        %v699 = vsub.f32 %v531, %v620
        %v700 = vsub.f32 %v444, %v623
        %v701 = vsub.f32 %v533, %v623
        %v702 = vsub.f32 %v447, %v626
        %v703 = vsub.f32 %v536, %v626
        %v704 = vsub.f32 %v449, %v629
        %v705 = vsub.f32 %v538, %v629
        %v706 = vsub.f32 %v452, %v632
        %v707 = vsub.f32 %v541, %v632
        %v708 = vsub.f32 %v454, %v635
        %v709 = vsub.f32 %v543, %v635
        %v710 = vsub.f32 %v457, %v638
        %v711 = vsub.f32 %v546, %v638
        %v712 = vsub.f32 %v459, %v641
        %v713 = vsub.f32 %v548, %v641
        %v714 = vsub.f32 %v462, %v644
        %v715 = vsub.f32 %v551, %v644
        %v716 = vsub.f32 %v464, %v647
        %v717 = vsub.f32 %v553, %v647
        %v718 = vsub.f32 %v467, %v650
        %v719 = vsub.f32 %v556, %v650
        %v720 = vsub.f32 %v469, %v653
        %v721 = vsub.f32 %v558, %v653
        %v722 = vsub.f32 %v472, %v656
        %v723 = vsub.f32 %v561, %v656
        %v724 = vsub.f32 %v474, %v659
        %v725 = vsub.f32 %v563, %v659
        %v726 = vsub.f32 %v477, %v662
        %v727 = vsub.f32 %v566, %v662
        %v728 = vsub.f32 %v479, %v665
        %v729 = vsub.f32 %v568, %v665
        %v730 = vmul.f32 %v666, 1.442695
        %v731 = vpow.pop %v730
        %v732 = vmul.f32 %v667, 1.442695
        %v733 = vpow.pop %v732
        %v734 = vmul.f32 %v668, 1.442695
        %v735 = vpow.pop %v734
        %v736 = vmul.f32 %v669, 1.442695
        %v737 = vpow.pop %v736
        %v738 = vmul.f32 %v670, 1.442695
        %v739 = vpow.pop %v738
        %v740 = vmul.f32 %v671, 1.442695
        %v741 = vpow.pop %v740
        %v742 = vmul.f32 %v672, 1.442695
        %v743 = vpow.pop %v742
        %v744 = vmul.f32 %v673, 1.442695
        %v745 = vpow.pop %v744
        %v746 = vmul.f32 %v674, 1.442695
        %v747 = vpow.pop %v746
        %v748 = vmul.f32 %v675, 1.442695
        %v749 = vpow.pop %v748
        %v750 = vmul.f32 %v676, 1.442695
        %v751 = vpow.pop %v750
        %v752 = vmul.f32 %v677, 1.442695
        %v753 = vpow.pop %v752
        %v754 = vmul.f32 %v678, 1.442695
        %v755 = vpow.pop %v754
        %v756 = vmul.f32 %v679, 1.442695
        %v757 = vpow.pop %v756
        %v758 = vmul.f32 %v680, 1.442695
        %v759 = vpow.pop %v758
        %v760 = vmul.f32 %v681, 1.442695
        %v761 = vpow.pop %v760
        %v762 = vmul.f32 %v682, 1.442695
        %v763 = vpow.pop %v762
        %v764 = vmul.f32 %v683, 1.442695
        %v765 = vpow.pop %v764
        %v766 = vmul.f32 %v684, 1.442695
        %v767 = vpow.pop %v766
        %v768 = vmul.f32 %v685, 1.442695
        %v769 = vpow.pop %v768
        %v770 = vmul.f32 %v686, 1.442695
        %v771 = vpow.pop %v770
        %v772 = vmul.f32 %v687, 1.442695
        %v773 = vpow.pop %v772
        %v774 = vmul.f32 %v688, 1.442695
        %v775 = vpow.pop %v774
        %v776 = vmul.f32 %v689, 1.442695
        %v777 = vpow.pop %v776
        %v778 = vmul.f32 %v690, 1.442695
        %v779 = vpow.pop %v778
        %v780 = vmul.f32 %v691, 1.442695
        %v781 = vpow.pop %v780
        %v782 = vmul.f32 %v692, 1.442695
        %v783 = vpow.pop %v782
        %v784 = vmul.f32 %v693, 1.442695
        %v785 = vpow.pop %v784
        %v786 = vmul.f32 %v694, 1.442695
        %v787 = vpow.pop %v786
        %v788 = vmul.f32 %v695, 1.442695
        %v789 = vpow.pop %v788
        %v790 = vmul.f32 %v696, 1.442695
        %v791 = vpow.pop %v790
        %v792 = vmul.f32 %v697, 1.442695
        %v793 = vpow.pop %v792
        %v794 = vmul.f32 %v698, 1.442695
        %v795 = vpow.pop %v794
        %v796 = vmul.f32 %v699, 1.442695
        %v797 = vpow.pop %v796
        %v798 = vmul.f32 %v700, 1.442695
        %v799 = vpow.pop %v798
        %v800 = vmul.f32 %v701, 1.442695
        %v801 = vpow.pop %v800
        %v802 = vmul.f32 %v702, 1.442695
        %v803 = vpow.pop %v802
        %v804 = vmul.f32 %v703, 1.442695
        %v805 = vpow.pop %v804
        %v806 = vmul.f32 %v704, 1.442695
        %v807 = vpow.pop %v806
        %v808 = vmul.f32 %v705, 1.442695
        %v809 = vpow.pop %v808
        %v810 = vmul.f32 %v706, 1.442695
        %v811 = vpow.pop %v810
        %v812 = vmul.f32 %v707, 1.442695
        %v813 = vpow.pop %v812
        %v814 = vmul.f32 %v708, 1.442695
        %v815 = vpow.pop %v814
        %v816 = vmul.f32 %v709, 1.442695
        %v817 = vpow.pop %v816
        %v818 = vmul.f32 %v710, 1.442695
        %v819 = vpow.pop %v818
        %v820 = vmul.f32 %v711, 1.442695
        %v821 = vpow.pop %v820
        %v822 = vmul.f32 %v712, 1.442695
        %v823 = vpow.pop %v822
        %v824 = vmul.f32 %v713, 1.442695
        %v825 = vpow.pop %v824
        %v826 = vmul.f32 %v714, 1.442695
        %v827 = vpow.pop %v826
        %v828 = vmul.f32 %v715, 1.442695
        %v829 = vpow.pop %v828
        %v830 = vmul.f32 %v716, 1.442695
        %v831 = vpow.pop %v830
        %v832 = vmul.f32 %v717, 1.442695
        %v833 = vpow.pop %v832
        %v834 = vmul.f32 %v718, 1.442695
        %v835 = vpow.pop %v834
        %v836 = vmul.f32 %v719, 1.442695
        %v837 = vpow.pop %v836
        %v838 = vmul.f32 %v720, 1.442695
        %v839 = vpow.pop %v838
        %v840 = vmul.f32 %v721, 1.442695
        %v841 = vpow.pop %v840
        %v842 = vmul.f32 %v722, 1.442695
        %v843 = vpow.pop %v842
        %v844 = vmul.f32 %v723, 1.442695
        %v845 = vpow.pop %v844
        %v846 = vmul.f32 %v724, 1.442695
        %v847 = vpow.pop %v846
        %v848 = vmul.f32 %v725, 1.442695
        %v849 = vpow.pop %v848
        %v850 = vmul.f32 %v726, 1.442695
        %v851 = vpow.pop %v850
        %v852 = vmul.f32 %v727, 1.442695
        %v853 = vpow.pop %v852
        %v854 = vmul.f32 %v728, 1.442695
        %v855 = vpow.pop %v854
        %v856 = vmul.f32 %v729, 1.442695
        %v857 = vpow.pop %v856
        %v858 = vadd.f32 %v731, %v733
        %859 = vadd.xlane.f32.xlu0 %v858
        %v860 = vpop.xlane.xlu0 %859
        %v861 = vadd.f32 %v735, %v737
        %862 = vadd.xlane.f32.xlu0 %v861
        %v863 = vpop.xlane.xlu0 %862
        %v864 = vadd.f32 %v739, %v741
        %865 = vadd.xlane.f32.xlu0 %v864
        %v866 = vpop.xlane.xlu0 %865
        %v867 = vadd.f32 %v743, %v745
        %868 = vadd.xlane.f32.xlu0 %v867
        %v869 = vpop.xlane.xlu0 %868
        %v870 = vadd.f32 %v747, %v749
        %871 = vadd.xlane.f32.xlu0 %v870
        %v872 = vpop.xlane.xlu0 %871
        %v873 = vadd.f32 %v751, %v753
        %874 = vadd.xlane.f32.xlu0 %v873
        %v875 = vpop.xlane.xlu0 %874
        %v876 = vadd.f32 %v755, %v757
        %877 = vadd.xlane.f32.xlu0 %v876
        %v878 = vpop.xlane.xlu0 %877
        %v879 = vadd.f32 %v759, %v761
        %880 = vadd.xlane.f32.xlu0 %v879
        %v881 = vpop.xlane.xlu0 %880
        %v882 = vadd.f32 %v763, %v765
        %883 = vadd.xlane.f32.xlu0 %v882
        %v884 = vpop.xlane.xlu0 %883
        %v885 = vadd.f32 %v767, %v769
        %886 = vadd.xlane.f32.xlu0 %v885
        %v887 = vpop.xlane.xlu0 %886
        %v888 = vadd.f32 %v771, %v773
        %889 = vadd.xlane.f32.xlu0 %v888
        %v890 = vpop.xlane.xlu0 %889
        %v891 = vadd.f32 %v775, %v777
        %892 = vadd.xlane.f32.xlu0 %v891
        %v893 = vpop.xlane.xlu0 %892
        %v894 = vadd.f32 %v779, %v781
        %895 = vadd.xlane.f32.xlu0 %v894
        %v896 = vpop.xlane.xlu0 %895
        %v897 = vadd.f32 %v783, %v785
        %898 = vadd.xlane.f32.xlu0 %v897
        %v899 = vpop.xlane.xlu0 %898
        %v900 = vadd.f32 %v787, %v789
        %901 = vadd.xlane.f32.xlu0 %v900
        %v902 = vpop.xlane.xlu0 %901
        %v903 = vadd.f32 %v791, %v793
        %904 = vadd.xlane.f32.xlu0 %v903
        %v905 = vpop.xlane.xlu0 %904
        %v906 = vadd.f32 %v795, %v797
        %907 = vadd.xlane.f32.xlu0 %v906
        %v908 = vpop.xlane.xlu0 %907
        %v909 = vadd.f32 %v799, %v801
        %910 = vadd.xlane.f32.xlu0 %v909
        %v911 = vpop.xlane.xlu0 %910
        %v912 = vadd.f32 %v803, %v805
        %913 = vadd.xlane.f32.xlu0 %v912
        %v914 = vpop.xlane.xlu0 %913
        %v915 = vadd.f32 %v807, %v809
        %916 = vadd.xlane.f32.xlu0 %v915
        %v917 = vpop.xlane.xlu0 %916
        %v918 = vadd.f32 %v811, %v813
        %919 = vadd.xlane.f32.xlu0 %v918
        %v920 = vpop.xlane.xlu0 %919
        %v921 = vadd.f32 %v815, %v817
        %922 = vadd.xlane.f32.xlu0 %v921
        %v923 = vpop.xlane.xlu0 %922
        %v924 = vadd.f32 %v819, %v821
        %925 = vadd.xlane.f32.xlu0 %v924
        %v926 = vpop.xlane.xlu0 %925
        %v927 = vadd.f32 %v823, %v825
        %928 = vadd.xlane.f32.xlu0 %v927
        %v929 = vpop.xlane.xlu0 %928
        %v930 = vadd.f32 %v827, %v829
        %931 = vadd.xlane.f32.xlu0 %v930
        %v932 = vpop.xlane.xlu0 %931
        %v933 = vadd.f32 %v831, %v833
        %934 = vadd.xlane.f32.xlu0 %v933
        %v935 = vpop.xlane.xlu0 %934
        %v936 = vadd.f32 %v835, %v837
        %937 = vadd.xlane.f32.xlu0 %v936
        %v938 = vpop.xlane.xlu0 %937
        %v939 = vadd.f32 %v839, %v841
        %940 = vadd.xlane.f32.xlu0 %v939
        %v941 = vpop.xlane.xlu0 %940
        %v942 = vadd.f32 %v843, %v845
        %943 = vadd.xlane.f32.xlu0 %v942
        %v944 = vpop.xlane.xlu0 %943
        %v945 = vadd.f32 %v847, %v849
        %946 = vadd.xlane.f32.xlu0 %v945
        %v947 = vpop.xlane.xlu0 %946
        %v948 = vadd.f32 %v851, %v853
        %949 = vadd.xlane.f32.xlu0 %v948
        %v950 = vpop.xlane.xlu0 %949
        %v951 = vadd.f32 %v855, %v857
        %952 = vadd.xlane.f32.xlu0 %v951
        %v953 = vpop.xlane.xlu0 %952
        %v954 = vrcp.pop %v860
        %v955 = vrcp.pop %v863
        %v956 = vrcp.pop %v866
        %v957 = vrcp.pop %v869
        %v958 = vrcp.pop %v872
        %v959 = vrcp.pop %v875
        %v960 = vrcp.pop %v878
        %v961 = vrcp.pop %v881
        %v962 = vrcp.pop %v884
        %v963 = vrcp.pop %v887
        %v964 = vrcp.pop %v890
        %v965 = vrcp.pop %v893
        %v966 = vrcp.pop %v896
        %v967 = vrcp.pop %v899
        %v968 = vrcp.pop %v902
        %v969 = vrcp.pop %v905
        %v970 = vrcp.pop %v908
        %v971 = vrcp.pop %v911
        %v972 = vrcp.pop %v914
        %v973 = vrcp.pop %v917
        %v974 = vrcp.pop %v920
        %v975 = vrcp.pop %v923
        %v976 = vrcp.pop %v926
        %v977 = vrcp.pop %v929
        %v978 = vrcp.pop %v932
        %v979 = vrcp.pop %v935
        %v980 = vrcp.pop %v938
        %v981 = vrcp.pop %v941
        %v982 = vrcp.pop %v944
        %v983 = vrcp.pop %v947
        %v984 = vrcp.pop %v950
        %v985 = vrcp.pop %v953
        %v986 = vmul.f32 %v731, %v954
        %v987 = vmul.f32 %v733, %v954
        %v988 = vmul.f32 %v735, %v955
        %v989 = vmul.f32 %v737, %v955
        %v990 = vmul.f32 %v739, %v956
        %v991 = vmul.f32 %v741, %v956
        %v992 = vmul.f32 %v743, %v957
        %v993 = vmul.f32 %v745, %v957
        %v994 = vmul.f32 %v747, %v958
        %v995 = vmul.f32 %v749, %v958
        %v996 = vmul.f32 %v751, %v959
        %v997 = vmul.f32 %v753, %v959
        %v998 = vmul.f32 %v755, %v960
        %v999 = vmul.f32 %v757, %v960
        %v1000 = vmul.f32 %v759, %v961
        %v1001 = vmul.f32 %v761, %v961
        %v1002 = vmul.f32 %v763, %v962
        %v1003 = vmul.f32 %v765, %v962
        %v1004 = vmul.f32 %v767, %v963
        %v1005 = vmul.f32 %v769, %v963
        %v1006 = vmul.f32 %v771, %v964
        %v1007 = vmul.f32 %v773, %v964
        %v1008 = vmul.f32 %v775, %v965
        %v1009 = vmul.f32 %v777, %v965
        %v1010 = vmul.f32 %v779, %v966
        %v1011 = vmul.f32 %v781, %v966
        %v1012 = vmul.f32 %v783, %v967
        %v1013 = vmul.f32 %v785, %v967
        %v1014 = vmul.f32 %v787, %v968
        %v1015 = vmul.f32 %v789, %v968
        %v1016 = vmul.f32 %v791, %v969
        %v1017 = vmul.f32 %v793, %v969
        %v1018 = vmul.f32 %v795, %v970
        %v1019 = vmul.f32 %v797, %v970
        %v1020 = vmul.f32 %v799, %v971
        %v1021 = vmul.f32 %v801, %v971
        %v1022 = vmul.f32 %v803, %v972
        %v1023 = vmul.f32 %v805, %v972
        %v1024 = vmul.f32 %v807, %v973
        %v1025 = vmul.f32 %v809, %v973
        %v1026 = vmul.f32 %v811, %v974
        %v1027 = vmul.f32 %v813, %v974
        %v1028 = vmul.f32 %v815, %v975
        %v1029 = vmul.f32 %v817, %v975
        %v1030 = vmul.f32 %v819, %v976
        %v1031 = vmul.f32 %v821, %v976
        %v1032 = vmul.f32 %v823, %v977
        %v1033 = vmul.f32 %v825, %v977
        %v1034 = vmul.f32 %v827, %v978
        %v1035 = vmul.f32 %v829, %v978
        %v1036 = vmul.f32 %v831, %v979
        %v1037 = vmul.f32 %v833, %v979
        %v1038 = vmul.f32 %v835, %v980
        %v1039 = vmul.f32 %v837, %v980
        %v1040 = vmul.f32 %v839, %v981
        %v1041 = vmul.f32 %v841, %v981
        %v1042 = vmul.f32 %v843, %v982
        %v1043 = vmul.f32 %v845, %v982
        %v1044 = vmul.f32 %v847, %v983
        %v1045 = vmul.f32 %v849, %v983
        %v1046 = vmul.f32 %v851, %v984
        %v1047 = vmul.f32 %v853, %v984
        %v1048 = vmul.f32 %v855, %v985
        %v1049 = vmul.f32 %v857, %v985
        %v1050 = vpack.c.bf16 %v988, %v986
        %v1051 = vpack.c.bf16 %v989, %v987
        %v1052 = vpack.c.bf16 %v992, %v990
        %v1053 = vpack.c.bf16 %v993, %v991
        %v1054 = vpack.c.bf16 %v996, %v994
        %v1055 = vpack.c.bf16 %v997, %v995
        %v1056 = vpack.c.bf16 %v1000, %v998
        %v1057 = vpack.c.bf16 %v1001, %v999
        %v1058 = vpack.c.bf16 %v1004, %v1002
        %v1059 = vpack.c.bf16 %v1005, %v1003
        %v1060 = vpack.c.bf16 %v1008, %v1006
        %v1061 = vpack.c.bf16 %v1009, %v1007
        %v1062 = vpack.c.bf16 %v1012, %v1010
        %v1063 = vpack.c.bf16 %v1013, %v1011
        %v1064 = vpack.c.bf16 %v1016, %v1014
        %v1065 = vpack.c.bf16 %v1017, %v1015
        %v1066 = vpack.c.bf16 %v1020, %v1018
        %v1067 = vpack.c.bf16 %v1021, %v1019
        %v1068 = vpack.c.bf16 %v1024, %v1022
        %v1069 = vpack.c.bf16 %v1025, %v1023
        %v1070 = vpack.c.bf16 %v1028, %v1026
        %v1071 = vpack.c.bf16 %v1029, %v1027
        %v1072 = vpack.c.bf16 %v1032, %v1030
        %v1073 = vpack.c.bf16 %v1033, %v1031
        %v1074 = vpack.c.bf16 %v1036, %v1034
        %v1075 = vpack.c.bf16 %v1037, %v1035
        %v1076 = vpack.c.bf16 %v1040, %v1038
        %v1077 = vpack.c.bf16 %v1041, %v1039
        %v1078 = vpack.c.bf16 %v1044, %v1042
        %v1079 = vpack.c.bf16 %v1045, %v1043
        %v1080 = vpack.c.bf16 %v1048, %v1046
        %v1081 = vpack.c.bf16 %v1049, %v1047
        %v1082 = vld [vmem:[#allocation5] sm:$0xff]
        %1084 = vst [vmem:[#allocation1] ss:$4 sm:$0xff] %v302
        %v1085 = vld.sshfl [vmem:[#allocation1] sm:$0xff pattern:$0x73625140]
        %v1086 = vld.sshfl [vmem:[#allocation1 + $0x8] sm:$0xff pattern:$0x73625140]
        %1089 = vmatpush.bf16.msra.mxu0 %v1064
        %1090 = vmatpush.bf16.msra.mxu0 %v1062
        %1091 = vmatpush.bf16.msra.mxu0 %v1060
        %1092 = vmatpush.bf16.msra.mxu0 %v1058
        %1093 = vmatpush.bf16.msra.mxu0 %v1056
        %1094 = vmatpush.bf16.msra.mxu0 %v1054
        %1095 = vmatpush.bf16.msra.mxu0 %v1052
        %1096 = vmatpush.bf16.msra.mxu0 %v1050
        %1097 = vmatmul.bf16.gmra.mxu0 %v1085
        %v1098 = vpop.f32.mrf.mxu0
        %v1099 = vadd.f32 0.0, %v1098
        %v1100 = vpop.f32.mrf.mxu0
        %1101 = vdwg.mxu0
        %1102 = vmatpush.bf16.msra.mxu0 %v1080
        %1103 = vmatpush.bf16.msra.mxu0 %v1078
        %1104 = vmatpush.bf16.msra.mxu0 %v1076
        %1105 = vmatpush.bf16.msra.mxu0 %v1074
        %1106 = vmatpush.bf16.msra.mxu0 %v1072
        %1107 = vmatpush.bf16.msra.mxu0 %v1070
        %1108 = vmatpush.bf16.msra.mxu0 %v1068
        %1109 = vmatpush.bf16.msra.mxu0 %v1066
        %1110 = vmatmul.bf16.gmra.mxu0 %v1086
        %v1111 = vpop.f32.mrf.mxu0
        %v1112 = vadd.f32 %v1099, %v1111
        %v1113 = vpop.f32.mrf.mxu0
        %1114 = vdwg.mxu0
        %1115 = vmatpush.bf16.msra.mxu0 %v1065
        %1116 = vmatpush.bf16.msra.mxu0 %v1063
        %1117 = vmatpush.bf16.msra.mxu0 %v1061
        %1118 = vmatpush.bf16.msra.mxu0 %v1059
        %1119 = vmatpush.bf16.msra.mxu0 %v1057
        %1120 = vmatpush.bf16.msra.mxu0 %v1055
        %1121 = vmatpush.bf16.msra.mxu0 %v1053
        %1122 = vmatpush.bf16.msra.mxu0 %v1051
        %1123 = vmatmul.bf16.gmra.mxu0 %v1085
        %v1124 = vpop.f32.mrf.mxu0
        %v1125 = vadd.f32 0.0, %v1124
        %v1126 = vpop.f32.mrf.mxu0
        %1127 = vdwg.mxu0
        %1128 = vmatpush.bf16.msra.mxu0 %v1081
        %1129 = vmatpush.bf16.msra.mxu0 %v1079
        %1130 = vmatpush.bf16.msra.mxu0 %v1077
        %1131 = vmatpush.bf16.msra.mxu0 %v1075
        %1132 = vmatpush.bf16.msra.mxu0 %v1073
        %1133 = vmatpush.bf16.msra.mxu0 %v1071
        %1134 = vmatpush.bf16.msra.mxu0 %v1069
        %1135 = vmatpush.bf16.msra.mxu0 %v1067
        %1136 = vmatmul.bf16.gmra.mxu0 %v1086
        %v1137 = vpop.f32.mrf.mxu0
        %v1138 = vadd.f32 %v1125, %v1137
        %v1139 = vpop.f32.mrf.mxu0
        %1140 = vdwg.mxu0
        %v1143 = vrot.slane %v1138, 4
        %vm1144 = vcmask 1043456
        %v1145 = vsel %vm1144, %v1112, %v1143
        %v1147 = vadd.f32 %v1082, %v1145
        %1148 = vst [vmem:[#allocation5] sm:$0xff] %v1147
        // Predicated region
        $region41: #{tpu_custom_call.1} parent=35 // pred_check
          %p1149 = pneg %p210
        $region42: #{tpu_custom_call.1} parent=35 // pred_check_branch
          %1151 = sbr.rel (%p1149) target = $region44
        $region43: #{tpu_custom_call.1} parent=35 // pred_region
          %s1152 = sld [smem:[#allocation6]]
          %v1153 = vld [vmem:[#allocation5] sm:$0xff]
          %v1154 = vstv %s1152
          %v1155 = vmul.f32 %v1154, %v1153
          %v1156 = vld [vmem:[%s208] sm:$0xff]
          %v1157 = vadd.f32 %v1155, %v1156
          %1158 = vst [vmem:[%s203] sm:$0xff] %v1157
        $region44: #{tpu_custom_call.1} parent=35 // pred_fallthru
          _
        %s1159 = sand.u32 %s128, 1
        %s1160 = scalar_lea.sflag [#allocation8], %s1159
        %s1161 = sand.u32 %s128, 1
        %s1162 = smul.addr %s1161, 8
        %s1163 = scalar_lea.vmem [#allocation7], %s1162
        // Predicated region
        $region45: #{tpu_custom_call.1} parent=35 // pred_check
          %p1164 = pneg %p138
        $region46: #{tpu_custom_call.1} parent=35 // pred_check_branch
          %1166 = sbr.rel (%p1164) target = $region48
        $region47: #{tpu_custom_call.1} parent=35 // pred_region
          %1168 = vsyncadd %s1160, 0
          %s1169 = smul.addr %s23, 2
          %s1170 = smul.addr %s1169, 4
          %s1171 = scalar_lea.hbm %s4, %s1170
          %s1173 = sshll.u32 %s1163, 4
          %s1174 = int_to_ptr.vmem [resolvable:$true] %s1173
          %s1175 = sshll.u32 %s1171, 4
          %s1176 = int_to_ptr.hbm [resolvable:$true] %s1175
          %1178 = dma.vmem_to_hbm [thread:$0]  %s1174, 128, %s1176, %s1160
        $region48: #{tpu_custom_call.1} parent=35 // pred_fallthru
          _
      $region36: #{tpu_custom_call.1} parent=5 // pred_fallthru
        _
      %p1179 = scmp.le.s32.totalorder 2, %s14
      // Predicated region
      $region49: #{tpu_custom_call.1} parent=5 // pred_check
        %p1180 = pneg %p1179
      $region50: #{tpu_custom_call.1} parent=5 // pred_check_branch
        %1182 = sbr.rel (%p1180) target = $region52
      $region51: #{tpu_custom_call.1} parent=5 // pred_region
        %s1183 = ssub.s32 %s14, 2
        // Predicated region
        $region53: #{tpu_custom_call.1} parent=51 // pred_check
          %p1184 = pneg %p144
        $region54: #{tpu_custom_call.1} parent=51 // pred_check_branch
          %1186 = sbr.rel (%p1184) target = $region56
        $region55: #{tpu_custom_call.1} parent=51 // pred_region
          %s1187 = sand.u32 %s129, 1
          %s1188 = scalar_lea.sflag [#allocation8], %s1187
          %s1189 = sand.u32 %s129, 1
          %s1190 = smul.addr %s1189, 8
          %s1191 = scalar_lea.vmem [#allocation7], %s1190
          %1193 = dma.done %s1188, 128
        $region56: #{tpu_custom_call.1} parent=51 // pred_fallthru
          _
      $region52: #{tpu_custom_call.1} parent=5 // pred_fallthru
        _
    $region6: #{tpu_custom_call.1} parent=1 // loop_footer
      %s18 = sadd.s32 1, %s14
    $region7: #{tpu_custom_call.1} parent=1 // loop_footer_branch
      %13 = sbr.rel target = $region3
    $region8: #{tpu_custom_call.1} parent=1 // loop_exit
      _
    %1194 = vsyncpa [#allocation8], 1
    %s1195 = scalar_lea.sflag [#allocation8], 1
    %1196 = vsyncpa %s1195, 1

</llo_original>
